<compile_context>
chip_gen: v5e
topology: v5e:2x2
jax: 0.10.0
libtpu: 0.0.40
codegen_flags: <defaults>
</compile_context>

<pallas_src>
import functools

import jax
import jax.numpy as jnp
from jax import lax
from jax.experimental import pallas as pl
from jax.experimental.pallas import tpu as pltpu


def _huber_kernel(out_ref, gt_ref, psum_ref, pcnt_ref, sum_acc, cnt_acc,
                  *, delta, hblocks, tile_rows, tail_valid, has_overflow):
    hi = pl.program_id(2)
    nhi = pl.num_programs(2)
    gb = pl.program_id(0) * nhi + hi          # global row-block index

    @pl.when(hi == 0)
    def _init():
        sum_acc[...] = jnp.zeros_like(sum_acc)
        cnt_acc[...] = jnp.zeros_like(cnt_acc)

    o = out_ref[...]
    g = gt_ref[...]
    if o.dtype != jnp.float32:
        o = o.astype(jnp.float32)
    if g.dtype != jnp.float32:
        g = g.astype(jnp.float32)

    err = jnp.abs(o - g)
    # NOTE: linear branch is exactly (err - 0.5*delta) as in the PyTorch module
    # (no `delta *` factor) — keep the where/select form.
    val = jnp.where(err < jnp.float32(delta),
                    0.5 * err * err,
                    err - jnp.float32(0.5 * delta))   # 0.5*delta folded at trace time
    pos = g > 0.0

    acc_rows, lane = sum_acc.shape

    def accum(p):
        # Fold this tile's masked contribution into the small resident
        # accumulators: sublane-group-aligned adds, pure VALU (no XLU).
        # jnp.where lowers to a true vselect, so garbage in OOB tail padding
        # (even Inf/NaN) is discarded, never multiplied.
        sum_acc[...] += jnp.where(p, val, 0.0).reshape(-1, acc_rows, lane).sum(axis=0)
        cnt_acc[...] += jnp.where(p, 1.0, 0.0).reshape(-1, acc_rows, lane).sum(axis=0)

    has_tail = tail_valid < tile_rows          # trace-time constant
    if has_tail:
        # Hot path: full tiles, no row-validity mask.
        @pl.when(gb < hblocks - 1)
        def _full():
            accum(pos)

        # Tail path: only the last row block pays for the iota/compare mask.
        # (Also excludes any clamped overflow block, since gb > hblocks - 1.)
        @pl.when(gb == hblocks - 1)
        def _tail():
            row_ids = lax.broadcasted_iota(jnp.int32, pos.shape, 0)
            accum(pos & (row_ids < tail_valid))
    elif has_overflow:
        # Row blocks past the end (duplicated by the megacore split's clamped
        # index_map) must contribute nothing.
        @pl.when(gb < hblocks)
        def _full():
            accum(pos)
    else:
        accum(pos)

    @pl.when(hi == nhi - 1)
    def _finalize():
        psum_ref[...] = sum_acc[...]
        pcnt_ref[...] = cnt_acc[...]


def huber_loss(outputs, gt, delta=10.0, *, lane=None, tile_rows=None):
    """outputs: [N, C, H, W]; gt: [N, 1, H, W]. Returns scalar f32 loss."""
    n, c, h, w = outputs.shape
    assert gt.shape == (n, 1, h, w), gt.shape
    plane = h * w

    # ---- lane-dense view of each plane (lane always a multiple of 128) ------
    need_pad = False
    if lane is None:
        lane = 0
        for cand in (1024, 512, 256, 128):
            if plane % cand == 0:
                lane = cand
                break
        if lane == 0:
            lane = 128
            need_pad = True
    else:
        assert lane % 128 == 0, "lane must be a multiple of 128"
        if plane % lane != 0:
            need_pad = True

    if need_pad:
        padded_plane = -(-plane // lane) * lane
        rows = padded_plane // lane
        # Wrapper-side channel-0 slice + zero pad: one extra mem-bound pass,
        # only for planes not divisible by 128.  gt pads are 0 -> excluded by
        # the mask; outputs pad value is irrelevant.
        out_flat = jnp.pad(outputs[:, 0:1, :, :].reshape(n, 1, plane),
                           ((0, 0), (0, 0), (0, padded_plane - plane)))
        gt_flat = jnp.pad(gt.reshape(n, 1, plane),
                          ((0, 0), (0, 0), (0, padded_plane - plane)))
        out_v = out_flat.reshape(n, 1, rows, lane)
        gt_v = gt_flat.reshape(n, 1, rows, lane)
    else:
        rows = plane // lane
        # Free contiguous reshape; channel 0 is selected by the BlockSpec
        # (no wrapper-side slice copy).
        out_v = outputs.reshape(n, c, rows, lane)
        gt_v = gt.reshape(n, 1, rows, lane)

    itemsize = jnp.dtype(outputs.dtype).itemsize
    gt_itemsize = jnp.dtype(gt.dtype).itemsize

    # ---- row tiling: ~2 MiB per input tile, multiple of 8 sublanes ----------
    if tile_rows is None:
        rows_cap = max(8, ((2 << 20) // (lane * itemsize)) // 8 * 8)
        tile_rows = min(rows, rows_cap)
    else:
        tile_rows = min(int(tile_rows), rows)
    if tile_rows < rows:
        tile_rows = max(8, (tile_rows // 8) * 8)
        tile_rows = min(tile_rows, rows)

    hblocks = -(-rows // tile_rows)                    # cdiv
    tail_valid = rows - (hblocks - 1) * tile_rows      # rows in the last block

    # ---- explicit 2-way megacore split over row blocks when the batch axis
    #      alone cannot occupy both TensorCores (v7x); harmless elsewhere -----
    split = 2 if (n % 2 == 1 and hblocks >= 2) else 1
    hb_per_core = -(-hblocks // split)
    has_overflow = split * hb_per_core > hblocks

    # ---- small fixed accumulator slab (vreg-aligned fold target) ------------
    if tile_rows % 32 == 0:
        acc_rows = 32
    elif tile_rows % 16 == 0:
        acc_rows = 16
    elif tile_rows % 8 == 0:
        acc_rows = 8
    else:
        acc_rows = tile_rows           # only when tile_rows == rows (tiny plane)

    kernel = functools.partial(
        _huber_kernel, delta=float(delta), hblocks=hblocks,
        tile_rows=tile_rows, tail_valid=tail_valid, has_overflow=has_overflow)

    if has_overflow:
        def in_index_map(ci, ni, hi):
            # Clamp the duplicated trailing block of the split; its
            # contribution is skipped in-kernel.
            return (ni, 0, jnp.minimum(ci * hb_per_core + hi, hblocks - 1), 0)
    else:
        def in_index_map(ci, ni, hi):
            return (ni, 0, ci * hb_per_core + hi, 0)

    in_spec = pl.BlockSpec((None, None, tile_rows, lane), in_index_map)
    out_spec = pl.BlockSpec((None, None, acc_rows, lane),
                            lambda ci, ni, hi: (ci, ni, 0, 0))

    # Explicit VMEM budget: 2 inputs x 2 buffers + 2 small accumulators
    # + 2 double-buffered output slabs, plus headroom.  (v5e default scoped
    # VMEM is only 16 MiB; v6e 32 MiB; v7x has 64 MiB physical per TC.)
    budget = (2 * tile_rows * lane * (itemsize + gt_itemsize)
              + 2 * acc_rows * lane * 4
              + 2 * 2 * acc_rows * lane * 4
              + (2 << 20))
    vmem_limit = int(min(max(budget, 16 << 20), 48 << 20))

    psum, pcnt = pl.pallas_call(
        kernel,
        out_shape=(jax.ShapeDtypeStruct((split, n, acc_rows, lane), jnp.float32),
                   jax.ShapeDtypeStruct((split, n, acc_rows, lane), jnp.float32)),
        grid_spec=pltpu.PrefetchScalarGridSpec(
            num_scalar_prefetch=0,
            grid=(split, n, hb_per_core),
            in_specs=[in_spec, in_spec],
            out_specs=[out_spec, out_spec],
            scratch_shapes=[
                pltpu.VMEM((acc_rows, lane), jnp.float32),   # masked loss sum
                pltpu.VMEM((acc_rows, lane), jnp.float32),   # mask count
            ],
        ),
        compiler_params=pltpu.CompilerParams(
            dimension_semantics=("parallel", "parallel", "arbitrary"),
            vmem_limit_bytes=vmem_limit,
        ),
    )(out_v, gt_v)

    # Tiny final reduction + divide in JAX (NaN when the mask is empty,
    # matching torch.mean of an empty tensor).
    return jnp.sum(psum) / jnp.sum(pcnt)


def _reference(outputs, gt, delta=10.0):
    o = outputs[:, 0:1, :, :]
    err = jnp.abs(o - gt)
    mask = gt > 0
    val = jnp.where(err < delta, 0.5 * err * err, err - 0.5 * delta)
    return jnp.sum(jnp.where(mask, val, 0.0)) / jnp.sum(mask.astype(jnp.float32))


if __name__ == "__main__":
    key = jax.random.PRNGKey(0)
    k1, k2, k3, k4, k5, k6 = jax.random.split(key, 6)

    # Test 1: shapes implied by the module spec (plane % 128 == 0, even batch).
    N, C, H, W = 2, 4, 16, 16
    outputs = jax.random.normal(k1, (N, C, H, W), dtype=jnp.float32) * 5.0
    gt = jax.random.normal(k2, (N, 1, H, W), dtype=jnp.float32) * 5.0
    loss = huber_loss(outputs, gt, delta=10.0)
    jax.block_until_ready(loss)
    ref = _reference(outputs, gt, delta=10.0)
    assert jnp.allclose(loss, ref, rtol=1e-5, atol=1e-5), (loss, ref)

    # Test 2: plane not a multiple of 128 -> wrapper zero-pad path.
    N2, C2, H2, W2 = 2, 3, 17, 7
    outputs2 = jax.random.normal(k3, (N2, C2, H2, W2), dtype=jnp.float32) * 8.0
    gt2 = jax.random.normal(k4, (N2, 1, H2, W2), dtype=jnp.float32) * 8.0
    loss2 = huber_loss(outputs2, gt2, delta=10.0)
    jax.block_until_ready(loss2)
    ref2 = _reference(outputs2, gt2, delta=10.0)
    assert jnp.allclose(loss2, ref2, rtol=1e-5, atol=1e-5), (loss2, ref2)

    # Test 3: odd batch -> 2-way core split, plus a partial tail row tile and a
    # clamped/skipped overflow block (rows=20, tile_rows=8 -> hblocks=3).
    N3, C3, H3, W3 = 1, 2, 40, 64
    outputs3 = jax.random.normal(k5, (N3, C3, H3, W3), dtype=jnp.float32) * 8.0
    gt3 = jax.random.normal(k6, (N3, 1, H3, W3), dtype=jnp.float32) * 8.0
    loss3 = huber_loss(outputs3, gt3, delta=10.0, lane=128, tile_rows=8)
    jax.block_until_ready(loss3)
    ref3 = _reference(outputs3, gt3, delta=10.0)
    assert jnp.allclose(loss3, ref3, rtol=1e-5, atol=1e-5), (loss3, ref3)

    print("KERNEL_OK")
</pallas_src>

<mosaic_0001>
module attributes {stable_mosaic.version = 11 : i64} {
  func.func @_huber_kernel(%arg0: i32, %arg1: i32, %arg2: i32, %arg3: memref<1x1x1x256xf32, #tpu.memory_space<vmem>>, %arg4: memref<1x1x1x256xf32, #tpu.memory_space<vmem>>, %arg5: memref<1x1x1x256xf32, #tpu.memory_space<vmem>>, %arg6: memref<1x1x1x256xf32, #tpu.memory_space<vmem>>, %arg7: memref<1x256xf32, #tpu.memory_space<vmem>>, %arg8: memref<1x256xf32, #tpu.memory_space<vmem>>) attributes {dimension_semantics = [#tpu.dimension_semantics<parallel>, #tpu.dimension_semantics<parallel>, #tpu.dimension_semantics<arbitrary>], iteration_bounds = array<i64: 1, 2, 1>, scalar_prefetch = 0 : i64, scratch_operands = 2 : i64, tpu.core_type = #tpu.core_type<tc>, window_params = [{transform_indices = @transform_0, window_bounds = array<i64: 1, 1, 1, 256>}, {transform_indices = @transform_1, window_bounds = array<i64: 1, 1, 1, 256>}, {transform_indices = @transform_2, window_bounds = array<i64: 1, 1, 1, 256>}, {transform_indices = @transform_3, window_bounds = array<i64: 1, 1, 1, 256>}]} {
    %c0_i32 = arith.constant 0 : i32
    %0 = arith.cmpi eq, %arg2, %c0_i32 : i32
    %1 = arith.extui %0 : i1 to i32
    %c0_i32_0 = arith.constant 0 : i32
    %2 = arith.cmpi ne, %1, %c0_i32_0 : i32
    scf.if %2 {
      %cst_26 = arith.constant 0.000000e+00 : f32
      %37 = vector.broadcast %cst_26 : f32 to vector<1x256xf32>
      %c0_27 = arith.constant 0 : index
      %c0_28 = arith.constant 0 : index
      %38 = vector.load %arg7[%c0_27, %c0_28] : memref<1x256xf32, #tpu.memory_space<vmem>>, vector<1x256xf32>
      tpu.vector_store %arg7[%c0_27, %c0_28], %37 {strides = array<i32>} : memref<1x256xf32, #tpu.memory_space<vmem>>, vector<1x256xf32>,
      %cst_29 = arith.constant 0.000000e+00 : f32
      %39 = vector.broadcast %cst_29 : f32 to vector<1x256xf32>
      %c0_30 = arith.constant 0 : index
      %c0_31 = arith.constant 0 : index
      %40 = vector.load %arg8[%c0_30, %c0_31] : memref<1x256xf32, #tpu.memory_space<vmem>>, vector<1x256xf32>
      tpu.vector_store %arg8[%c0_30, %c0_31], %39 {strides = array<i32>} : memref<1x256xf32, #tpu.memory_space<vmem>>, vector<1x256xf32>,
    } else {
    }
    %c0 = arith.constant 0 : index
    %c0_1 = arith.constant 0 : index
    %c0_2 = arith.constant 0 : index
    %c0_3 = arith.constant 0 : index
    %3 = vector.load %arg3[%c0, %c0_1, %c0_2, %c0_3] : memref<1x1x1x256xf32, #tpu.memory_space<vmem>>, vector<1x1x1x256xf32>
    %4 = vector.shape_cast %3 : vector<1x1x1x256xf32> to vector<1x256xf32>
    %c0_4 = arith.constant 0 : index
    %c0_5 = arith.constant 0 : index
    %c0_6 = arith.constant 0 : index
    %c0_7 = arith.constant 0 : index
    %5 = vector.load %arg4[%c0_4, %c0_5, %c0_6, %c0_7] : memref<1x1x1x256xf32, #tpu.memory_space<vmem>>, vector<1x1x1x256xf32>
    %6 = vector.shape_cast %5 : vector<1x1x1x256xf32> to vector<1x256xf32>
    %7 = arith.subf %4, %6 : vector<1x256xf32>
    %8 = math.absf %7 : vector<1x256xf32>
    %cst = arith.constant 1.000000e+01 : f32
    %9 = vector.broadcast %cst : f32 to vector<1x256xf32>
    %10 = arith.cmpf olt, %8, %9 : vector<1x256xf32>
    %cst_8 = arith.constant 5.000000e-01 : f32
    %11 = vector.broadcast %cst_8 : f32 to vector<1x256xf32>
    %12 = arith.mulf %11, %8 : vector<1x256xf32>
    %13 = arith.mulf %12, %8 : vector<1x256xf32>
    %cst_9 = arith.constant 5.000000e+00 : f32
    %14 = vector.broadcast %cst_9 : f32 to vector<1x256xf32>
    %15 = arith.subf %8, %14 : vector<1x256xf32>
    %16 = arith.select %10, %13, %15 : vector<1x256xi1>, vector<1x256xf32>
    %cst_10 = arith.constant 0.000000e+00 : f32
    %17 = vector.broadcast %cst_10 : f32 to vector<1x256xf32>
    %18 = arith.cmpf ogt, %6, %17 : vector<1x256xf32>
    %c0_11 = arith.constant 0 : index
    %c0_12 = arith.constant 0 : index
    %19 = vector.load %arg7[%c0_11, %c0_12] : memref<1x256xf32, #tpu.memory_space<vmem>>, vector<1x256xf32>
    %cst_13 = arith.constant 0.000000e+00 : f32
    %20 = vector.broadcast %cst_13 : f32 to vector<1x256xf32>
    %21 = arith.select %18, %16, %20 : vector<1x256xi1>, vector<1x256xf32>
    %22 = vector.shape_cast %21 : vector<1x256xf32> to vector<1x1x256xf32>
    %cst_14 = arith.constant dense<0.000000e+00> : vector<1x256xf32>
    %23 = vector.multi_reduction <add>, %22, %cst_14 [0] : vector<1x1x256xf32> to vector<1x256xf32>
    %24 = arith.addf %19, %23 : vector<1x256xf32>
    %c0_15 = arith.constant 0 : index
    %c0_16 = arith.constant 0 : index
    %25 = vector.load %arg7[%c0_15, %c0_16] : memref<1x256xf32, #tpu.memory_space<vmem>>, vector<1x256xf32>
    tpu.vector_store %arg7[%c0_15, %c0_16], %24 {strides = array<i32>} : memref<1x256xf32, #tpu.memory_space<vmem>>, vector<1x256xf32>,
    %c0_17 = arith.constant 0 : index
    %c0_18 = arith.constant 0 : index
    %26 = vector.load %arg8[%c0_17, %c0_18] : memref<1x256xf32, #tpu.memory_space<vmem>>, vector<1x256xf32>
    %cst_19 = arith.constant 1.000000e+00 : f32
    %cst_20 = arith.constant 0.000000e+00 : f32
    %27 = vector.broadcast %cst_19 : f32 to vector<1x256xf32>
    %28 = vector.broadcast %cst_20 : f32 to vector<1x256xf32>
    %29 = arith.select %18, %27, %28 : vector<1x256xi1>, vector<1x256xf32>
    %30 = vector.shape_cast %29 : vector<1x256xf32> to vector<1x1x256xf32>
    %cst_21 = arith.constant dense<0.000000e+00> : vector<1x256xf32>
    %31 = vector.multi_reduction <add>, %30, %cst_21 [0] : vector<1x1x256xf32> to vector<1x256xf32>
    %32 = arith.addf %26, %31 : vector<1x256xf32>
    %c0_22 = arith.constant 0 : index
    %c0_23 = arith.constant 0 : index
    %33 = vector.load %arg8[%c0_22, %c0_23] : memref<1x256xf32, #tpu.memory_space<vmem>>, vector<1x256xf32>
    tpu.vector_store %arg8[%c0_22, %c0_23], %32 {strides = array<i32>} : memref<1x256xf32, #tpu.memory_space<vmem>>, vector<1x256xf32>,
    %c0_i32_24 = arith.constant 0 : i32
    %34 = arith.cmpi eq, %arg2, %c0_i32_24 : i32
    %35 = arith.extui %34 : i1 to i32
    %c0_i32_25 = arith.constant 0 : i32
    %36 = arith.cmpi ne, %35, %c0_i32_25 : i32
    scf.if %36 {
      %c0_26 = arith.constant 0 : index
      %c0_27 = arith.constant 0 : index
      %37 = vector.load %arg7[%c0_26, %c0_27] : memref<1x256xf32, #tpu.memory_space<vmem>>, vector<1x256xf32>
      %c0_28 = arith.constant 0 : index
      %c0_29 = arith.constant 0 : index
      %c0_30 = arith.constant 0 : index
      %c0_31 = arith.constant 0 : index
      %38 = vector.load %arg5[%c0_28, %c0_29, %c0_30, %c0_31] : memref<1x1x1x256xf32, #tpu.memory_space<vmem>>, vector<1x1x1x256xf32>
      %39 = vector.shape_cast %38 : vector<1x1x1x256xf32> to vector<1x256xf32>
      %40 = vector.shape_cast %37 : vector<1x256xf32> to vector<1x1x1x256xf32>
      tpu.vector_store %arg5[%c0_28, %c0_29, %c0_30, %c0_31], %40 {strides = array<i32>} : memref<1x1x1x256xf32, #tpu.memory_space<vmem>>, vector<1x1x1x256xf32>,
      %c0_32 = arith.constant 0 : index
      %c0_33 = arith.constant 0 : index
      %41 = vector.load %arg8[%c0_32, %c0_33] : memref<1x256xf32, #tpu.memory_space<vmem>>, vector<1x256xf32>
      %c0_34 = arith.constant 0 : index
      %c0_35 = arith.constant 0 : index
      %c0_36 = arith.constant 0 : index
      %c0_37 = arith.constant 0 : index
      %42 = vector.load %arg6[%c0_34, %c0_35, %c0_36, %c0_37] : memref<1x1x1x256xf32, #tpu.memory_space<vmem>>, vector<1x1x1x256xf32>
      %43 = vector.shape_cast %42 : vector<1x1x1x256xf32> to vector<1x256xf32>
      %44 = vector.shape_cast %41 : vector<1x256xf32> to vector<1x1x1x256xf32>
      tpu.vector_store %arg6[%c0_34, %c0_35, %c0_36, %c0_37], %44 {strides = array<i32>} : memref<1x1x1x256xf32, #tpu.memory_space<vmem>>, vector<1x1x1x256xf32>,
    } else {
    }
    return
  }
  func.func @transform_0(%arg0: i32, %arg1: i32, %arg2: i32) -> (i32, i32, i32, i32) {
    %c1_i32 = arith.constant 1 : i32
    %0 = arith.muli %arg0, %c1_i32 : i32
    %1 = arith.addi %0, %arg2 : i32
    %c0_i32 = arith.constant 0 : i32
    %c0_i32_0 = arith.constant 0 : i32
    %c0_i32_1 = arith.constant 0 : i32
    return %arg1, %c0_i32, %1, %c0_i32_0 : i32, i32, i32, i32
  }
  func.func @transform_1(%arg0: i32, %arg1: i32, %arg2: i32) -> (i32, i32, i32, i32) {
    %c1_i32 = arith.constant 1 : i32
    %0 = arith.muli %arg0, %c1_i32 : i32
    %1 = arith.addi %0, %arg2 : i32
    %c0_i32 = arith.constant 0 : i32
    %c0_i32_0 = arith.constant 0 : i32
    %c0_i32_1 = arith.constant 0 : i32
    return %arg1, %c0_i32, %1, %c0_i32_0 : i32, i32, i32, i32
  }
  func.func @transform_2(%arg0: i32, %arg1: i32, %arg2: i32) -> (i32, i32, i32, i32) {
    %c0_i32 = arith.constant 0 : i32
    %c0_i32_0 = arith.constant 0 : i32
    %c0_i32_1 = arith.constant 0 : i32
    return %arg0, %arg1, %c0_i32, %c0_i32_0 : i32, i32, i32, i32
  }
  func.func @transform_3(%arg0: i32, %arg1: i32, %arg2: i32) -> (i32, i32, i32, i32) {
    %c0_i32 = arith.constant 0 : i32
    %c0_i32_0 = arith.constant 0 : i32
    %c0_i32_1 = arith.constant 0 : i32
    return %arg0, %arg1, %c0_i32, %c0_i32_0 : i32, i32, i32, i32
  }
}

</mosaic_0001>

<llo_original>
// kernel: tpu_custom_call.1
$region0: #{tpu_custom_call.1}
  #allocation0 [shape = 'u32[]', space=smem, size = 0x4, offset = 0x4, fixed_abs, tag = 'smem constant byte address 0x4 - core index']
  #allocation1 [shape = 'u32[72,128]{1,0:T(1,128)}', space=vmem, size = 0x9000, scoped, tag = 'internal scratch']
  #allocation2 [shape = 'f32[1,256]{1,0:T(1,128)}', space=vmem, size = 0x400, scoped, tag = 'scratch operand']
  #allocation3 [shape = 'f32[1,256]{1,0:T(1,128)}', space=vmem, size = 0x400, scoped, tag = 'scratch operand']
  %s0 = inlined_call_operand.hbm [shape: f32[2,4,1,256], index: 0, kind: input, shape index: {}]
  %s1 = inlined_call_operand.hbm [shape: f32[2,1,1,256], index: 1, kind: input, shape index: {}]
  %s2 = inlined_call_operand.hbm [shape: f32[1,2,1,256], index: 2, kind: output, shape index: {0}]
  %s3 = inlined_call_operand.hbm [shape: f32[1,2,1,256], index: 3, kind: output, shape index: {1}]
  %4 = xla_tuple %s2, %s3
  %s5 = sld [smem:[#allocation0]]
  $region65: #{tpu_custom_call.1} parent=0
    _
  %s7 = ssub.s32 1, %s5
  %s8 = scalar_select 0, %s7, %s5
  $region1: #{tpu_custom_call.1} parent=0
    #allocation4 [shape = 'u8[2048]{0}', space=vmem, size = 0x800, scoped, tag = 'input window, operand 0']
    #allocation5 [shape = 's32[2]{0}', space=sflag, size = 0x8, scoped, tag = 'scoped memory for tpu_custom_call.1']
    #allocation6 [shape = 's32[2]{0}', space=sflag, size = 0x8, scoped, tag = 'scoped memory for tpu_custom_call.1']
    #allocation7 [shape = 'u8[2048]{0}', space=vmem, size = 0x800, scoped, tag = 'input window, operand 1']
    #allocation8 [shape = 's32[2]{0}', space=sflag, size = 0x8, scoped, tag = 'scoped memory for tpu_custom_call.1']
    #allocation9 [shape = 'u8[2048]{0}', space=vmem, size = 0x800, scoped, tag = 'output window, operand 0']
    #allocation10 [shape = 'u8[2048]{0}', space=vmem, size = 0x800, scoped, tag = 'output window, operand 1']
    #allocation11 [shape = 's32[2]{0}', space=sflag, size = 0x8, scoped, tag = 'scoped memory for tpu_custom_call.1']
    %9 = vsyncpa [#allocation5], 0
    %s10 = scalar_lea.sflag [#allocation5], 1
    %11 = vsyncpa %s10, 0
    %12 = vsyncpa [#allocation8], 0
    %s13 = scalar_lea.sflag [#allocation8], 1
    %14 = vsyncpa %s13, 0
    %15 = vsyncpa [#allocation6], 0
    %s16 = scalar_lea.sflag [#allocation6], 1
    %17 = vsyncpa %s16, 0
    %18 = vsyncpa [#allocation11], 0
    %s19 = scalar_lea.sflag [#allocation11], 1
    %20 = vsyncpa %s19, 0
    loop: start=0, step=1, limit=4
    $region2: #{tpu_custom_call.1} parent=1 // loop_pre_header
      _
    $region3: #{tpu_custom_call.1} parent=1 // loop_header
      %s22 = sphi 0, %s26
      %p23 = scmp.ge.s32.totalorder %s22, 4
      %s29 = sphi 0, %s48
      %s30 = sphi 0, %s44
      %s31 = sphi 0, %s40
      %s32 = sphi 0, %s29
      %s33 = sphi 0, %s30
      %s34 = sphi 0, %s31
      %s35 = sphi 0, %s32
      %s36 = sphi 0, %s33
      %s37 = sphi 0, %s34
      %s55 = sphi 0, %s57
      %s58 = sphi 0, %s55
      %s59 = sphi 0, %s58
      %s75 = sphi 0, %s59
      %s85 = sphi 0, %s87
      %s88 = sphi 0, %s85
      %s89 = sphi 0, %s88
      %s105 = sphi 0, %s89
      %s113 = sphi 0, %s115
      %s116 = sphi 0, %s113
      %s117 = sphi 0, %s116
      %s133 = sphi 0, %s117
      %s141 = sphi 0, %s143
      %s144 = sphi 0, %s141
      %s145 = sphi 0, %s144
      %s161 = sphi 0, %s145
    $region4: #{tpu_custom_call.1} parent=1 // loop_header_branch
      %25 = sbr.rel (%p23) target = $region8
    $region5: #{tpu_custom_call.1} parent=1 // loop_body
      %s27 = ssub.s32 %s22, 1
      %s28 = ssub.s32 %s22, 2
      %s38 = sadd.s32 1, %s31
      %p39 = scmp.ge.s32.totalorder %s38, 1
      %s40 = scalar_select %p39, 0, %s38
      %s41 = sadd.s32 1, %s30
      %s42 = scalar_select %p39, %s41, %s30
      %p43 = scmp.ge.s32.totalorder %s42, 2
      %s44 = scalar_select %p43, 0, %s42
      %s45 = sadd.s32 1, %s29
      %s46 = scalar_select %p43, %s45, %s29
      %p47 = scmp.ge.s32.totalorder %s46, 1
      %s48 = scalar_select %p47, 0, %s46
      %s49 = sadd.s32 %s29, %s31
      %s50 = sadd.s32 %s48, %s40
      %s51 = ssub.s32 %s30, %s44
      %s52 = ssub.s32 %s49, %s50
      %s53 = sor.u32 %s51, %s52
      %p54 = scmp.eq.s32.totalorder %s53, 0
      %s56 = sadd.s32 %s55, 1
      %s57 = scalar_select %p54, %s55, %s56
      %p60 = pneg %p54
      %p61 = scmp.eq.s32.totalorder %s22, 1
      %p62 = por %p60, %p61
      %p63 = scmp.ne.s32.totalorder %s55, %s58
      %p64 = scmp.eq.s32.totalorder %s22, 0
      %p65 = por %p63, %p64
      %p66 = scmp.ne.s32.totalorder %s55, %s58
      %p67 = scmp.eq.s32.totalorder %s27, 1
      %p68 = por %p66, %p67
      %p69 = scmp.ne.s32.totalorder %s58, %s59
      %p70 = scmp.eq.s32.totalorder %s27, 0
      %p71 = por %p69, %p70
      %p72 = scmp.ne.s32.totalorder %s58, %s59
      %p73 = scmp.eq.s32.totalorder %s28, 1
      %p74 = por %p72, %p73
      %p76 = scmp.ne.s32.totalorder %s59, %s75
      %p77 = scmp.eq.s32.totalorder %s28, 0
      %p78 = por %p76, %p77
      %s79 = sadd.s32 %s29, %s31
      %s80 = sadd.s32 %s48, %s40
      %s81 = ssub.s32 %s30, %s44
      %s82 = ssub.s32 %s79, %s80
      %s83 = sor.u32 %s81, %s82
      %p84 = scmp.eq.s32.totalorder %s83, 0
      %s86 = sadd.s32 %s85, 1
      %s87 = scalar_select %p84, %s85, %s86
      %p90 = pneg %p84
      %p91 = scmp.eq.s32.totalorder %s22, 1
      %p92 = por %p90, %p91
      %p93 = scmp.ne.s32.totalorder %s85, %s88
      %p94 = scmp.eq.s32.totalorder %s22, 0
      %p95 = por %p93, %p94
      %p96 = scmp.ne.s32.totalorder %s85, %s88
      %p97 = scmp.eq.s32.totalorder %s27, 1
      %p98 = por %p96, %p97
      %p99 = scmp.ne.s32.totalorder %s88, %s89
      %p100 = scmp.eq.s32.totalorder %s27, 0
      %p101 = por %p99, %p100
      %p102 = scmp.ne.s32.totalorder %s88, %s89
      %p103 = scmp.eq.s32.totalorder %s28, 1
      %p104 = por %p102, %p103
      %p106 = scmp.ne.s32.totalorder %s89, %s105
      %p107 = scmp.eq.s32.totalorder %s28, 0
      %p108 = por %p106, %p107
      %s109 = ssub.s32 %s29, %s48
      %s110 = ssub.s32 %s30, %s44
      %s111 = sor.u32 %s109, %s110
      %p112 = scmp.eq.s32.totalorder %s111, 0
      %s114 = sadd.s32 %s113, 1
      %s115 = scalar_select %p112, %s113, %s114
      %p118 = pneg %p112
      %p119 = scmp.eq.s32.totalorder %s22, 1
      %p120 = por %p118, %p119
      %p121 = scmp.ne.s32.totalorder %s113, %s116
      %p122 = scmp.eq.s32.totalorder %s22, 0
      %p123 = por %p121, %p122
      %p124 = scmp.ne.s32.totalorder %s113, %s116
      %p125 = scmp.eq.s32.totalorder %s27, 1
      %p126 = por %p124, %p125
      %p127 = scmp.ne.s32.totalorder %s116, %s117
      %p128 = scmp.eq.s32.totalorder %s27, 0
      %p129 = por %p127, %p128
      %p130 = scmp.ne.s32.totalorder %s116, %s117
      %p131 = scmp.eq.s32.totalorder %s28, 1
      %p132 = por %p130, %p131
      %p134 = scmp.ne.s32.totalorder %s117, %s133
      %p135 = scmp.eq.s32.totalorder %s28, 0
      %p136 = por %p134, %p135
      %s137 = ssub.s32 %s29, %s48
      %s138 = ssub.s32 %s30, %s44
      %s139 = sor.u32 %s137, %s138
      %p140 = scmp.eq.s32.totalorder %s139, 0
      %s142 = sadd.s32 %s141, 1
      %s143 = scalar_select %p140, %s141, %s142
      %p146 = pneg %p140
      %p147 = scmp.eq.s32.totalorder %s22, 1
      %p148 = por %p146, %p147
      %p149 = scmp.ne.s32.totalorder %s141, %s144
      %p150 = scmp.eq.s32.totalorder %s22, 0
      %p151 = por %p149, %p150
      %p152 = scmp.ne.s32.totalorder %s141, %s144
      %p153 = scmp.eq.s32.totalorder %s27, 1
      %p154 = por %p152, %p153
      %p155 = scmp.ne.s32.totalorder %s144, %s145
      %p156 = scmp.eq.s32.totalorder %s27, 0
      %p157 = por %p155, %p156
      %p158 = scmp.ne.s32.totalorder %s144, %s145
      %p159 = scmp.eq.s32.totalorder %s28, 1
      %p160 = por %p158, %p159
      %p162 = scmp.ne.s32.totalorder %s145, %s161
      %p163 = scmp.eq.s32.totalorder %s28, 0
      %p164 = por %p162, %p163
      %p165 = scmp.le.s32.totalorder 1, %s22
      %p166 = scmp.lt.s32.totalorder %s22, 3
      %p167 = pnand %p165, %p166
      %p168 = pneg %p167
      // Predicated region
      $region9: #{tpu_custom_call.1} parent=5 // pred_check
        _
      $region10: #{tpu_custom_call.1} parent=5 // pred_check_branch
        %170 = sbr.rel (%p167) target = $region12
      $region11: #{tpu_custom_call.1} parent=5 // pred_region
        %s171 = ssub.s32 %s22, 1
      $region12: #{tpu_custom_call.1} parent=5 // pred_fallthru
        _
      %p172 = scmp.lt.s32.totalorder %s22, 2
      // Predicated region
      $region13: #{tpu_custom_call.1} parent=5 // pred_check
        %p173 = pneg %p172
      $region14: #{tpu_custom_call.1} parent=5 // pred_check_branch
        %175 = sbr.rel (%p173) target = $region16
      $region15: #{tpu_custom_call.1} parent=5 // pred_region
        // Predicated region
        $region17: #{tpu_custom_call.1} parent=15 // pred_check
          %p176 = pneg %p65
        $region18: #{tpu_custom_call.1} parent=15 // pred_check_branch
          %178 = sbr.rel (%p176) target = $region20
        $region19: #{tpu_custom_call.1} parent=15 // pred_region
          %s179 = sand.u32 %s55, 1
          %s180 = scalar_lea.sflag [#allocation5], %s179
          %s181 = sand.u32 %s55, 1
          %s182 = smul.addr %s181, 2
          %s183 = scalar_lea.vmem [#allocation4], %s182
          %s184 = sadd.s32 %s29, %s31
          %186 = vsyncadd %s180, 0
          %s187 = smul.addr %s184, 2
          %s188 = smul.addr %s30, 8
          %s189 = sadd.s32 %s187, %s188
          %s190 = scalar_lea.hbm %s0, %s189
          %s192 = sshll.u32 %s190, 4
          %s193 = int_to_ptr.hbm [resolvable:$true] %s192
          %s194 = sshll.u32 %s183, 4
          %s195 = int_to_ptr.vmem [resolvable:$true] %s194
          %197 = dma.hbm_to_vmem [thread:$0]  %s193, 32, %s195, %s180
        $region20: #{tpu_custom_call.1} parent=15 // pred_fallthru
          _
        // Predicated region
        $region21: #{tpu_custom_call.1} parent=15 // pred_check
          %p198 = pneg %p95
        $region22: #{tpu_custom_call.1} parent=15 // pred_check_branch
          %200 = sbr.rel (%p198) target = $region24
        $region23: #{tpu_custom_call.1} parent=15 // pred_region
          %s201 = sand.u32 %s85, 1
          %s202 = scalar_lea.sflag [#allocation8], %s201
          %s203 = sand.u32 %s85, 1
          %s204 = smul.addr %s203, 2
          %s205 = scalar_lea.vmem [#allocation7], %s204
          %s206 = sadd.s32 %s29, %s31
          %208 = vsyncadd %s202, 0
          %s209 = smul.addr %s206, 2
          %s210 = smul.addr %s30, 2
          %s211 = sadd.s32 %s209, %s210
          %s212 = scalar_lea.hbm %s1, %s211
          %s214 = sshll.u32 %s212, 4
          %s215 = int_to_ptr.hbm [resolvable:$true] %s214
          %s216 = sshll.u32 %s205, 4
          %s217 = int_to_ptr.vmem [resolvable:$true] %s216
          %219 = dma.hbm_to_vmem [thread:$0]  %s215, 32, %s217, %s202
        $region24: #{tpu_custom_call.1} parent=15 // pred_fallthru
          _
      $region16: #{tpu_custom_call.1} parent=5 // pred_fallthru
        _
      %p220 = scmp.le.s32.totalorder 1, %s22
      %p221 = scmp.lt.s32.totalorder %s22, 3
      %p222 = pnand %p220, %p221
      %p223 = pneg %p222
      // Predicated region
      $region25: #{tpu_custom_call.1} parent=5 // pred_check
        _
      $region26: #{tpu_custom_call.1} parent=5 // pred_check_branch
        %225 = sbr.rel (%p222) target = $region28
      $region27: #{tpu_custom_call.1} parent=5 // pred_region
        %s226 = ssub.s32 %s22, 1
        %s227 = sand.u32 %s58, 1
        %s228 = scalar_lea.sflag [#allocation5], %s227
        %s229 = sand.u32 %s58, 1
        %s230 = smul.addr %s229, 2
        %s231 = scalar_lea.vmem [#allocation4], %s230
        // Predicated region
        $region29: #{tpu_custom_call.1} parent=27 // pred_check
          %p232 = pneg %p71
        $region30: #{tpu_custom_call.1} parent=27 // pred_check_branch
          %234 = sbr.rel (%p232) target = $region32
        $region31: #{tpu_custom_call.1} parent=27 // pred_region
          %236 = dma.done %s228, 32
        $region32: #{tpu_custom_call.1} parent=27 // pred_fallthru
          _
        %s237 = sand.u32 %s88, 1
        %s238 = scalar_lea.sflag [#allocation8], %s237
        %s239 = sand.u32 %s88, 1
        %s240 = smul.addr %s239, 2
        %s241 = scalar_lea.vmem [#allocation7], %s240
        // Predicated region
        $region33: #{tpu_custom_call.1} parent=27 // pred_check
          %p242 = pneg %p101
        $region34: #{tpu_custom_call.1} parent=27 // pred_check_branch
          %244 = sbr.rel (%p242) target = $region36
        $region35: #{tpu_custom_call.1} parent=27 // pred_region
          %246 = dma.done %s238, 32
        $region36: #{tpu_custom_call.1} parent=27 // pred_fallthru
          _
        %s247 = sand.u32 %s58, 1
        %s248 = scalar_lea.sflag [#allocation5], %s247
        %s249 = sand.u32 %s58, 1
        %s250 = smul.addr %s249, 2
        %s251 = scalar_lea.vmem [#allocation4], %s250
        %p252 = pneg %p71
        %p253 = pneg %p68
        %s254 = sand.u32 %s88, 1
        %s255 = scalar_lea.sflag [#allocation8], %s254
        %s256 = sand.u32 %s88, 1
        %s257 = smul.addr %s256, 2
        %s258 = scalar_lea.vmem [#allocation7], %s257
        %p259 = pneg %p101
        %p260 = pneg %p98
        %p261 = pneg %p129
        %p262 = pneg %p126
        %s263 = sand.u32 %s116, 1
        %s264 = scalar_lea.sflag [#allocation6], %s263
        %s265 = sand.u32 %s116, 1
        %s266 = smul.addr %s265, 2
        %s267 = scalar_lea.vmem [#allocation9], %s266
        %p268 = pneg %p157
        %p269 = pneg %p154
        %s270 = sand.u32 %s144, 1
        %s271 = scalar_lea.sflag [#allocation11], %s270
        %s272 = sand.u32 %s144, 1
        %s273 = smul.addr %s272, 2
        %s274 = scalar_lea.vmem [#allocation10], %s273
        %s275 = sadd.s32 %s32, %s34
        %s276 = sadd.s32 %s32, %s34
        %p277 = scmp.eq.s32.totalorder %s34, 0
        // Predicated region
        $region37: #{tpu_custom_call.1} parent=27 // pred_check
          %p278 = pneg %p277
        $region38: #{tpu_custom_call.1} parent=27 // pred_check_branch
          %280 = sbr.rel (%p278) target = $region40
        $region39: #{tpu_custom_call.1} parent=27 // pred_region
          %v281 = vlaneseq
          %vm282 = vcmp.ge.s32.totalorder %v281, 0
          %vm283 = vcmp.lt.s32.totalorder %v281, 256
          %vm284 = vmand %vm282, %vm283
          %285 = vst.msk [vmem:[#allocation2] sm:$0x3] %vm284, 0.0
          %286 = vst.msk [vmem:[#allocation3] sm:$0x3] %vm284, 0.0
        $region40: #{tpu_custom_call.1} parent=27 // pred_fallthru
          _
        %v287 = vld [vmem:[%s231] sm:$0x3]
        %v288 = vld [vmem:[%s241] sm:$0x3]
        %v289 = vsub.f32 %v287, %v288
        %v290 = vand.u32 2147483647, %v289
        %vm291 = vcmp.lt.f32.partialorder %v290, 10.0
        %v292 = vmul.f32 %v290, 0.5
        %v293 = vmul.f32 %v292, %v290
        %v294 = vsub.f32 %v290, 5.0
        %v295 = vsel %vm291, %v293, %v294
        %vm296 = vcmp.gt.f32.partialorder %v288, 0.0
        %v297 = vld [vmem:[#allocation2] sm:$0x3]
        %v298 = vsel %vm296, %v295, 0.0
        %v299 = vadd.f32 %v298, 0.0
        %v300 = vadd.f32 %v297, %v299
        %v301 = vlaneseq
        %vm302 = vcmp.ge.s32.totalorder %v301, 0
        %vm303 = vcmp.lt.s32.totalorder %v301, 256
        %vm304 = vmand %vm302, %vm303
        %305 = vst.msk [vmem:[#allocation2] sm:$0x3] %vm304, %v300
        %v306 = vld [vmem:[#allocation3] sm:$0x3]
        %v307 = vsel %vm296, 1.0, 0.0
        %v308 = vadd.f32 %v307, 0.0
        %v309 = vadd.f32 %v306, %v308
        %310 = vst.msk [vmem:[#allocation3] sm:$0x3] %vm304, %v309
        // Predicated region
        $region41: #{tpu_custom_call.1} parent=27 // pred_check
          %p311 = pneg %p277
        $region42: #{tpu_custom_call.1} parent=27 // pred_check_branch
          %313 = sbr.rel (%p311) target = $region44
        $region43: #{tpu_custom_call.1} parent=27 // pred_region
          %v314 = vld [vmem:[#allocation2] sm:$0x3]
          %315 = vst.msk [vmem:[%s267] sm:$0x3] %vm304, %v314
          %v316 = vld [vmem:[#allocation3] sm:$0x3]
          %317 = vst.msk [vmem:[%s274] sm:$0x3] %vm304, %v316
        $region44: #{tpu_custom_call.1} parent=27 // pred_fallthru
          _
        %s318 = sand.u32 %s116, 1
        %s319 = scalar_lea.sflag [#allocation6], %s318
        %s320 = sand.u32 %s116, 1
        %s321 = smul.addr %s320, 2
        %s322 = scalar_lea.vmem [#allocation9], %s321
        %s323 = sand.u32 %s144, 1
        %s324 = scalar_lea.sflag [#allocation11], %s323
        %s325 = sand.u32 %s144, 1
        %s326 = smul.addr %s325, 2
        %s327 = scalar_lea.vmem [#allocation10], %s326
        // Predicated region
        $region45: #{tpu_custom_call.1} parent=27 // pred_check
          %p328 = pneg %p126
        $region46: #{tpu_custom_call.1} parent=27 // pred_check_branch
          %330 = sbr.rel (%p328) target = $region48
        $region47: #{tpu_custom_call.1} parent=27 // pred_region
          %332 = vsyncadd %s319, 0
          %s333 = smul.addr %s33, 2
          %s334 = smul.addr %s32, 4
          %s335 = sadd.s32 %s333, %s334
          %s336 = scalar_lea.hbm %s2, %s335
          %s338 = sshll.u32 %s322, 4
          %s339 = int_to_ptr.vmem [resolvable:$true] %s338
          %s340 = sshll.u32 %s336, 4
          %s341 = int_to_ptr.hbm [resolvable:$true] %s340
          %343 = dma.vmem_to_hbm [thread:$0]  %s339, 32, %s341, %s319
        $region48: #{tpu_custom_call.1} parent=27 // pred_fallthru
          _
        // Predicated region
        $region49: #{tpu_custom_call.1} parent=27 // pred_check
          %p344 = pneg %p154
        $region50: #{tpu_custom_call.1} parent=27 // pred_check_branch
          %346 = sbr.rel (%p344) target = $region52
        $region51: #{tpu_custom_call.1} parent=27 // pred_region
          %348 = vsyncadd %s324, 0
          %s349 = smul.addr %s33, 2
          %s350 = smul.addr %s32, 4
          %s351 = sadd.s32 %s349, %s350
          %s352 = scalar_lea.hbm %s3, %s351
          %s354 = sshll.u32 %s327, 4
          %s355 = int_to_ptr.vmem [resolvable:$true] %s354
          %s356 = sshll.u32 %s352, 4
          %s357 = int_to_ptr.hbm [resolvable:$true] %s356
          %359 = dma.vmem_to_hbm [thread:$0]  %s355, 32, %s357, %s324
        $region52: #{tpu_custom_call.1} parent=27 // pred_fallthru
          _
      $region28: #{tpu_custom_call.1} parent=5 // pred_fallthru
        _
      %p360 = scmp.le.s32.totalorder 2, %s22
      // Predicated region
      $region53: #{tpu_custom_call.1} parent=5 // pred_check
        %p361 = pneg %p360
      $region54: #{tpu_custom_call.1} parent=5 // pred_check_branch
        %363 = sbr.rel (%p361) target = $region56
      $region55: #{tpu_custom_call.1} parent=5 // pred_region
        %s364 = ssub.s32 %s22, 2
        // Predicated region
        $region57: #{tpu_custom_call.1} parent=55 // pred_check
          %p365 = pneg %p132
        $region58: #{tpu_custom_call.1} parent=55 // pred_check_branch
          %367 = sbr.rel (%p365) target = $region60
        $region59: #{tpu_custom_call.1} parent=55 // pred_region
          %s368 = sand.u32 %s117, 1
          %s369 = scalar_lea.sflag [#allocation6], %s368
          %s370 = sand.u32 %s117, 1
          %s371 = smul.addr %s370, 2
          %s372 = scalar_lea.vmem [#allocation9], %s371
          %374 = dma.done %s369, 32
        $region60: #{tpu_custom_call.1} parent=55 // pred_fallthru
          _
        // Predicated region
        $region61: #{tpu_custom_call.1} parent=55 // pred_check
          %p375 = pneg %p160
        $region62: #{tpu_custom_call.1} parent=55 // pred_check_branch
          %377 = sbr.rel (%p375) target = $region64
        $region63: #{tpu_custom_call.1} parent=55 // pred_region
          %s378 = sand.u32 %s145, 1
          %s379 = scalar_lea.sflag [#allocation11], %s378
          %s380 = sand.u32 %s145, 1
          %s381 = smul.addr %s380, 2
          %s382 = scalar_lea.vmem [#allocation10], %s381
          %384 = dma.done %s379, 32
        $region64: #{tpu_custom_call.1} parent=55 // pred_fallthru
          _
      $region56: #{tpu_custom_call.1} parent=5 // pred_fallthru
        _
    $region6: #{tpu_custom_call.1} parent=1 // loop_footer
      %s26 = sadd.s32 1, %s22
    $region7: #{tpu_custom_call.1} parent=1 // loop_footer_branch
      %21 = sbr.rel target = $region3
    $region8: #{tpu_custom_call.1} parent=1 // loop_exit
      _
    %385 = vsyncpa [#allocation5], 1
    %s386 = scalar_lea.sflag [#allocation5], 1
    %387 = vsyncpa %s386, 1
    %388 = vsyncpa [#allocation8], 1
    %s389 = scalar_lea.sflag [#allocation8], 1
    %390 = vsyncpa %s389, 1
    %391 = vsyncpa [#allocation6], 1
    %s392 = scalar_lea.sflag [#allocation6], 1
    %393 = vsyncpa %s392, 1
    %394 = vsyncpa [#allocation11], 1
    %s395 = scalar_lea.sflag [#allocation11], 1
    %396 = vsyncpa %s395, 1

</llo_original>
